<compile_context>
chip_gen: v7x
topology: tpu7x:2x2x1
jax: 0.10.0
libtpu: 0.0.40
codegen_flags: <defaults>
</compile_context>

<pallas_src>
import functools

import jax
import jax.numpy as jnp
from jax import lax
from jax.experimental import pallas as pl
from jax.experimental.pallas import tpu as pltpu


def _round_up(x, m):
    return ((x + m - 1) // m) * m


# ----------------------------- Pallas kernel -------------------------------

def _inner_product_kernel(bias_ref, a_ref, b_ref, o_ref, acc_ref, *, act):
    """One (tm, tn) output tile of act(input1 @ input2.T + bias).

    Grid = (M/tm, N/tn, K/tk).  K is the innermost ("arbitrary") reduction axis,
    so acc_ref (f32 VMEM scratch) stays resident across all K steps of a tile.

      bias_ref : (1,) f32 scalar in SMEM
      a_ref    : (tm, tk)  rows of input1
      b_ref    : (tn, tk)  rows of input2 (contracted on its last dim -> b.T)
    """
    @pl.when(pl.program_id(2) == 0)
    def _():
        acc_ref[...] = jnp.zeros_like(acc_ref)

    # a @ b.T without materializing the transpose: contract the last dims (NT matmul).
    acc_ref[...] += lax.dot_general(
        a_ref[...], b_ref[...],
        dimension_numbers=(((1,), (1,)), ((), ())),
        preferred_element_type=jnp.float32)

    @pl.when(pl.program_id(2) == pl.num_programs(2) - 1)
    def _():
        y = acc_ref[...] + bias_ref[0]
        if act == "relu":
            y = jnp.maximum(y, 0.0)
        elif act == "sigmoid":
            y = jax.nn.sigmoid(y)
        # act == "none": identity (the module's default act=lambda x: x)
        o_ref[...] = y.astype(o_ref.dtype)


# ----------------------------- wrapper --------------------------------------

@functools.partial(jax.jit, static_argnames=("act", "cast_to_bf16"))
def inner_product_decoder(input1, input2, bias, *, act="none", cast_to_bf16=False):
    """act(input1 @ input2.T + bias); input1:(M,K), input2:(N,K), bias scalar."""
    M, K = input1.shape
    N, K2 = input2.shape
    assert K == K2, (input1.shape, input2.shape)

    in_dtype = jnp.bfloat16 if cast_to_bf16 else jnp.float32
    sub = 16 if cast_to_bf16 else 8            # sublane packing (bf16 packs 2 rows)

    # Tile sizes: lane-dense output (tn multiple of 128, up to 512), deep K tiles.
    tm = min(256, _round_up(M, sub))
    tn = min(512, _round_up(N, 128))
    tk = min(1024, _round_up(K, 128))
    Mp, Np, Kp = _round_up(M, tm), _round_up(N, tn), _round_up(K, tk)

    a = input1.astype(in_dtype)
    b = input2.astype(in_dtype)
    if (Mp, Kp) != (M, K):
        a = jnp.pad(a, ((0, Mp - M), (0, Kp - K)))
    if (Np, Kp) != (N, K):
        b = jnp.pad(b, ((0, Np - N), (0, Kp - K)))
    bias1d = jnp.asarray(bias, jnp.float32).reshape(1)

    out = pl.pallas_call(
        functools.partial(_inner_product_kernel, act=act),
        out_shape=jax.ShapeDtypeStruct((Mp, Np), jnp.float32),
        grid=(Mp // tm, Np // tn, Kp // tk),
        in_specs=[
            pl.BlockSpec(memory_space=pltpu.MemorySpace.SMEM),      # scalar bias
            pl.BlockSpec((tm, tk), lambda i, j, k: (i, k)),          # input1 tile
            pl.BlockSpec((tn, tk), lambda i, j, k: (j, k)),          # input2 tile
        ],
        out_specs=pl.BlockSpec((tm, tn), lambda i, j, k: (i, j)),
        scratch_shapes=[pltpu.VMEM((tm, tn), jnp.float32)],
        compiler_params=pltpu.CompilerParams(
            dimension_semantics=("parallel", "parallel", "arbitrary"),
            vmem_limit_bytes=48 * 1024 * 1024),   # headroom; stays under v7x's 64 MiB
    )(bias1d, a, b)

    if (Mp, Np) != (M, N):
        out = out[:M, :N]
    return out


# ----------------------------- main -----------------------------------------

if __name__ == "__main__":
    key = jax.random.PRNGKey(0)
    k1, k2, k3 = jax.random.split(key, 3)

    # Small shapes consistent with a link-prediction decoder: node embeddings
    # input1:(8, 32), input2:(12, 32)  ->  output (8, 12).
    input1 = jax.random.normal(k1, (8, 32), jnp.float32)
    input2 = jax.random.normal(k2, (12, 32), jnp.float32)
    bias = jax.random.uniform(k3, (1,), jnp.float32)      # Parameter(torch.rand(1))

    # Default activation: identity (act=lambda x: x in the PyTorch module).
    out = inner_product_decoder(input1, input2, bias, act="none")
    out = jax.block_until_ready(out)

    ref = input1 @ input2.T + bias[0]
    assert out.shape == (8, 12), out.shape
    assert bool(jnp.all(jnp.isfinite(out)))
    assert bool(jnp.allclose(out, ref, rtol=1e-5, atol=1e-5)), (
        float(jnp.max(jnp.abs(out - ref))))

    # Fused sigmoid activation path (common choice for this decoder).
    out_sig = jax.block_until_ready(
        inner_product_decoder(input1, input2, bias, act="sigmoid"))
    ref_sig = jax.nn.sigmoid(ref)
    assert bool(jnp.allclose(out_sig, ref_sig, rtol=1e-5, atol=1e-5))

    print("KERNEL_OK")
</pallas_src>

<mosaic_0001>
module attributes {stable_mosaic.version = 11 : i64} {
  func.func @_inner_product_kernel(%arg0: i32, %arg1: i32, %arg2: i32, %arg3: memref<1xf32, #tpu.memory_space<smem>>, %arg4: memref<8x128xf32, #tpu.memory_space<vmem>>, %arg5: memref<128x128xf32, #tpu.memory_space<vmem>>, %arg6: memref<8x128xf32, #tpu.memory_space<vmem>>, %arg7: memref<8x128xf32, #tpu.memory_space<vmem>>) attributes {dimension_semantics = [#tpu.dimension_semantics<parallel>, #tpu.dimension_semantics<parallel>, #tpu.dimension_semantics<arbitrary>], iteration_bounds = array<i64: 1, 1, 1>, scalar_prefetch = 0 : i64, scratch_operands = 1 : i64, tpu.core_type = #tpu.core_type<tc>, window_params = [{transform_indices = @transform_0, window_bounds = array<i64: 1>}, {transform_indices = @transform_1, window_bounds = array<i64: 8, 128>}, {transform_indices = @transform_2, window_bounds = array<i64: 128, 128>}, {transform_indices = @transform_3, window_bounds = array<i64: 8, 128>}]} {
    %c0_i32 = arith.constant 0 : i32
    %0 = arith.cmpi eq, %arg2, %c0_i32 : i32
    %1 = arith.extui %0 : i1 to i32
    %c0_i32_0 = arith.constant 0 : i32
    %2 = arith.cmpi ne, %1, %c0_i32_0 : i32
    scf.if %2 {
      %cst_10 = arith.constant 0.000000e+00 : f32
      %12 = vector.broadcast %cst_10 : f32 to vector<8x128xf32>
      %c0_11 = arith.constant 0 : index
      %c0_12 = arith.constant 0 : index
      %13 = vector.load %arg7[%c0_11, %c0_12] : memref<8x128xf32, #tpu.memory_space<vmem>>, vector<8x128xf32>
      tpu.vector_store %arg7[%c0_11, %c0_12], %12 {strides = array<i32>} : memref<8x128xf32, #tpu.memory_space<vmem>>, vector<8x128xf32>,
    } else {
    }
    %c0 = arith.constant 0 : index
    %c0_1 = arith.constant 0 : index
    %3 = vector.load %arg7[%c0, %c0_1] : memref<8x128xf32, #tpu.memory_space<vmem>>, vector<8x128xf32>
    %c0_2 = arith.constant 0 : index
    %c0_3 = arith.constant 0 : index
    %4 = vector.load %arg4[%c0_2, %c0_3] : memref<8x128xf32, #tpu.memory_space<vmem>>, vector<8x128xf32>
    %c0_4 = arith.constant 0 : index
    %c0_5 = arith.constant 0 : index
    %5 = vector.load %arg5[%c0_4, %c0_5] : memref<128x128xf32, #tpu.memory_space<vmem>>, vector<128x128xf32>
    %cst = arith.constant dense<0.000000e+00> : vector<8x128xf32>
    %6 = tpu.matmul %4, %5, %cst {dimension_numbers = #tpu.dot_dimension_numbers<[1], [1], [0], [0], [0, 0, 1, 0], [], []>} : vector<8x128xf32>, vector<128x128xf32>, vector<8x128xf32> -> vector<8x128xf32>
    %7 = arith.addf %3, %6 : vector<8x128xf32>
    %c0_6 = arith.constant 0 : index
    %c0_7 = arith.constant 0 : index
    %8 = vector.load %arg7[%c0_6, %c0_7] : memref<8x128xf32, #tpu.memory_space<vmem>>, vector<8x128xf32>
    tpu.vector_store %arg7[%c0_6, %c0_7], %7 {strides = array<i32>} : memref<8x128xf32, #tpu.memory_space<vmem>>, vector<8x128xf32>,
    %c0_i32_8 = arith.constant 0 : i32
    %9 = arith.cmpi eq, %arg2, %c0_i32_8 : i32
    %10 = arith.extui %9 : i1 to i32
    %c0_i32_9 = arith.constant 0 : i32
    %11 = arith.cmpi ne, %10, %c0_i32_9 : i32
    scf.if %11 {
      %c0_10 = arith.constant 0 : index
      %c0_11 = arith.constant 0 : index
      %12 = vector.load %arg7[%c0_10, %c0_11] : memref<8x128xf32, #tpu.memory_space<vmem>>, vector<8x128xf32>
      %c0_12 = arith.constant 0 : index
      %13 = memref.load %arg3[%c0_12] : memref<1xf32, #tpu.memory_space<smem>>
      %14 = vector.broadcast %13 : f32 to vector<8x128xf32>
      %15 = arith.addf %12, %14 : vector<8x128xf32>
      %c0_13 = arith.constant 0 : index
      %c0_14 = arith.constant 0 : index
      %16 = vector.load %arg6[%c0_13, %c0_14] : memref<8x128xf32, #tpu.memory_space<vmem>>, vector<8x128xf32>
      tpu.vector_store %arg6[%c0_13, %c0_14], %15 {strides = array<i32>} : memref<8x128xf32, #tpu.memory_space<vmem>>, vector<8x128xf32>,
    } else {
    }
    return
  }
  func.func @transform_0(%arg0: i32, %arg1: i32, %arg2: i32) -> i32 {
    %c0_i32 = arith.constant 0 : i32
    %c0_i32_0 = arith.constant 0 : i32
    return %c0_i32 : i32
  }
  func.func @transform_1(%arg0: i32, %arg1: i32, %arg2: i32) -> (i32, i32) {
    %c0_i32 = arith.constant 0 : i32
    return %arg0, %arg2 : i32, i32
  }
  func.func @transform_2(%arg0: i32, %arg1: i32, %arg2: i32) -> (i32, i32) {
    %c0_i32 = arith.constant 0 : i32
    return %arg1, %arg2 : i32, i32
  }
  func.func @transform_3(%arg0: i32, %arg1: i32, %arg2: i32) -> (i32, i32) {
    %c0_i32 = arith.constant 0 : i32
    return %arg0, %arg1 : i32, i32
  }
}

</mosaic_0001>

<llo_original>
// kernel: inner_product_decoder.1
$region0: #{inner_product_decoder.1}
  #allocation0 [shape = 'u32[]', space=smem, size = 0x4, offset = 0x4, fixed_abs, tag = 'smem constant byte address 0x4 - core index']
  #allocation1 [shape = 'u32[144,128]{1,0:T(1,128)}', space=vmem, size = 0x12000, scoped, tag = 'internal scratch']
  #allocation2 [shape = 'f32[8,128]{1,0:T(8,128)}', space=vmem, size = 0x1000, scoped, tag = 'scratch operand']
  #allocation3 [shape = 'f32[1]{0:T(128)S(6)}', space=smem, size = 0x200, scoped, tag = 'scoped memory for inner_product_decoder.1']
  %s0 = inlined_call_operand.<no memory space> [shape: f32[1], index: 0, kind: input, shape index: {}]
  %s1 = inlined_call_operand.vmem [shape: f32[8,128], index: 1, kind: input, shape index: {}]
  %s2 = inlined_call_operand.vmem [shape: f32[128,128], index: 2, kind: input, shape index: {}]
  %s3 = inlined_call_operand.hbm [shape: f32[8,128], index: 3, kind: output, shape index: {}]
  %s4 = sld [smem:[#allocation0]]
  $region30: #{inner_product_decoder.1} parent=0
    _
  %s6 = ssub.s32 1, %s4
  %s7 = scalar_select 0, %s6, %s4
  %8 = sst [smem:[#allocation3]] %s0
  $region1: #{inner_product_decoder.1} parent=0
    #allocation4 [shape = 'u8[4096]{0}', space=vmem, size = 0x1000, scoped, tag = 'output window, operand 0, single buffered']
    #allocation5 [shape = 's32[1]{0}', space=sflag, size = 0x4, scoped, tag = 'scoped memory for inner_product_decoder.1']
    %9 = vsyncpa [#allocation5], 0
    // Predicated region
    $region2: #{inner_product_decoder.1} parent=1 // pred_check
      _
    $region3: #{inner_product_decoder.1} parent=1 // pred_check_branch
      %11 = sbr.rel (0) target = $region5
    $region4: #{inner_product_decoder.1} parent=1 // pred_region
      _
    $region5: #{inner_product_decoder.1} parent=1 // pred_fallthru
      _
    // Predicated region
    $region6: #{inner_product_decoder.1} parent=1 // pred_check
      _
    $region7: #{inner_product_decoder.1} parent=1 // pred_check_branch
      %13 = sbr.rel (0) target = $region9
    $region8: #{inner_product_decoder.1} parent=1 // pred_region
      _
    $region9: #{inner_product_decoder.1} parent=1 // pred_fallthru
      _
    // Predicated region
    $region10: #{inner_product_decoder.1} parent=1 // pred_check
      _
    $region11: #{inner_product_decoder.1} parent=1 // pred_check_branch
      %15 = sbr.rel (0) target = $region13
    $region12: #{inner_product_decoder.1} parent=1 // pred_region
      _
    $region13: #{inner_product_decoder.1} parent=1 // pred_fallthru
      _
    %p16 = scmp.eq.s32.totalorder 0, 0
    // Predicated region
    $region14: #{inner_product_decoder.1} parent=1 // pred_check
      %p17 = pneg %p16
    $region15: #{inner_product_decoder.1} parent=1 // pred_check_branch
      %19 = sbr.rel (%p17) target = $region17
    $region16: #{inner_product_decoder.1} parent=1 // pred_region
      %20 = vst [vmem:[#allocation2] sm:$0xff] 0.0
    $region17: #{inner_product_decoder.1} parent=1 // pred_fallthru
      _
    %v21 = vld [vmem:[#allocation2] sm:$0xff]
    %v22 = vld [vmem:[%s1] sm:$0xff]
    %v23 = vld [vmem:[%s2] sm:$0xff]
    %v24 = vld [vmem:[%s2 + $0x8] sm:$0xff]
    %v25 = vld [vmem:[%s2 + $0x10] sm:$0xff]
    %v26 = vld [vmem:[%s2 + $0x18] sm:$0xff]
    %v27 = vld [vmem:[%s2 + $0x20] sm:$0xff]
    %v28 = vld [vmem:[%s2 + $0x28] sm:$0xff]
    %v29 = vld [vmem:[%s2 + $0x30] sm:$0xff]
    %v30 = vld [vmem:[%s2 + $0x38] sm:$0xff]
    %v31 = vld [vmem:[%s2 + $0x40] sm:$0xff]
    %v32 = vld [vmem:[%s2 + $0x48] sm:$0xff]
    %v33 = vld [vmem:[%s2 + $0x50] sm:$0xff]
    %v34 = vld [vmem:[%s2 + $0x58] sm:$0xff]
    %v35 = vld [vmem:[%s2 + $0x60] sm:$0xff]
    %v36 = vld [vmem:[%s2 + $0x68] sm:$0xff]
    %v37 = vld [vmem:[%s2 + $0x70] sm:$0xff]
    %v38 = vld [vmem:[%s2 + $0x78] sm:$0xff]
    %39 = vmatprep.subr.mxu0 0.0
    %40 = vmatpush1.xpose.msra.mxu0 %v23
    %41 = vmatprep.subr.mxu0 0.0
    %42 = vmatpush1.xpose.msra.mxu0 %v24
    %43 = vmatprep.subr.mxu0 0.0
    %44 = vmatpush1.xpose.msra.mxu0 %v25
    %45 = vmatprep.subr.mxu0 0.0
    %46 = vmatpush1.xpose.msra.mxu0 %v26
    %47 = vmatprep.subr.mxu0 0.0
    %48 = vmatpush1.xpose.msra.mxu0 %v27
    %49 = vmatprep.subr.mxu0 0.0
    %50 = vmatpush1.xpose.msra.mxu0 %v28
    %51 = vmatprep.subr.mxu0 0.0
    %52 = vmatpush1.xpose.msra.mxu0 %v29
    %53 = vmatprep.subr.mxu0 0.0
    %54 = vmatpush1.xpose.msra.mxu0 %v30
    %55 = vmatprep.subr.mxu0 0.0
    %56 = vmatpush1.xpose.msra.mxu0 %v31
    %57 = vmatprep.subr.mxu0 0.0
    %58 = vmatpush1.xpose.msra.mxu0 %v32
    %59 = vmatprep.subr.mxu0 0.0
    %60 = vmatpush1.xpose.msra.mxu0 %v33
    %61 = vmatprep.subr.mxu0 0.0
    %62 = vmatpush1.xpose.msra.mxu0 %v34
    %63 = vmatprep.subr.mxu0 0.0
    %64 = vmatpush1.xpose.msra.mxu0 %v35
    %65 = vmatprep.subr.mxu0 0.0
    %66 = vmatpush1.xpose.msra.mxu0 %v36
    %67 = vmatprep.subr.mxu0 0.0
    %68 = vmatpush1.xpose.msra.mxu0 %v37
    %69 = vmatprep.subr.mxu0 0.0
    %70 = vmatpush1.xpose.msra.mxu0 %v38
    %71 = vmatprep.subr.mxu0 0.0
    %72 = vmatpush1.xpose.msra.mxu0 0.0
    %73 = vmatprep.subr.mxu0 0.0
    %74 = vmatpush1.xpose.msra.mxu0 0.0
    %75 = vmatprep.subr.mxu0 0.0
    %76 = vmatpush1.xpose.msra.mxu0 0.0
    %77 = vmatprep.subr.mxu0 0.0
    %78 = vmatpush1.xpose.msra.mxu0 0.0
    %79 = vmatprep.subr.mxu0 0.0
    %80 = vmatpush1.xpose.msra.mxu0 0.0
    %81 = vmatprep.subr.mxu0 0.0
    %82 = vmatpush1.xpose.msra.mxu0 0.0
    %83 = vmatprep.subr.mxu0 0.0
    %84 = vmatpush1.xpose.msra.mxu0 0.0
    %85 = vmatprep.subr.mxu0 0.0
    %86 = vmatpush1.xpose.msra.mxu0 0.0
    %87 = vmatprep.subr.mxu0 0.0
    %88 = vmatpush1.xpose.msra.mxu0 0.0
    %89 = vmatprep.subr.mxu0 0.0
    %90 = vmatpush1.xpose.msra.mxu0 0.0
    %91 = vmatprep.subr.mxu0 0.0
    %92 = vmatpush1.xpose.msra.mxu0 0.0
    %93 = vmatprep.subr.mxu0 0.0
    %94 = vmatpush1.xpose.msra.mxu0 0.0
    %95 = vmatprep.subr.mxu0 0.0
    %96 = vmatpush1.xpose.msra.mxu0 0.0
    %97 = vmatprep.subr.mxu0 0.0
    %98 = vmatpush1.xpose.msra.mxu0 0.0
    %99 = vmatprep.subr.mxu0 0.0
    %100 = vmatpush1.xpose.msra.mxu0 0.0
    %101 = vmatprep.subr.mxu0 0.0
    %102 = vmatpush1.xpose.msra.mxu0 0.0
    %103 = vmatprep.mubr.f32.mxu0 0.0
    %104 = vmatmul.mubr.f32.gmra.mrb[0].mxu0 %v22
    %v105 = vpop.f32.mrb[0].mxu0
    %v106 = vadd.f32 0.0, %v105
    %v107 = vpop.f32.mrb[0].mxu0
    %108 = vdwg.mxu0
    %v109 = vadd.f32 %v21, %v106
    %110 = vst [vmem:[#allocation2] sm:$0xff] %v109
    // Predicated region
    $region18: #{inner_product_decoder.1} parent=1 // pred_check
      %p111 = pneg %p16
    $region19: #{inner_product_decoder.1} parent=1 // pred_check_branch
      %113 = sbr.rel (%p111) target = $region21
    $region20: #{inner_product_decoder.1} parent=1 // pred_region
      %v114 = vld [vmem:[#allocation2] sm:$0xff]
      %s115 = sld [smem:[#allocation3]]
      %v116 = vstv %s115
      %v117 = vadd.f32 %v114, %v116
      %118 = vst [vmem:[#allocation4] sm:$0xff] %v117
    $region21: #{inner_product_decoder.1} parent=1 // pred_fallthru
      _
    // Predicated region
    $region22: #{inner_product_decoder.1} parent=1 // pred_check
      _
    $region23: #{inner_product_decoder.1} parent=1 // pred_check_branch
      %120 = sbr.rel (0) target = $region25
    $region24: #{inner_product_decoder.1} parent=1 // pred_region
      %s122 = ssub.s32 128, 128
      %123 = vsyncadd [#allocation5], %s122
      %s125 = sshll.u32 [#allocation4], 4
      %s126 = int_to_ptr.vmem [resolvable:$true] %s125
      %128 = dma.vmem_to_hbm [thread:$0]  %s126, 128, %s3, [#allocation5]
    $region25: #{inner_product_decoder.1} parent=1 // pred_fallthru
      _
    // Predicated region
    $region26: #{inner_product_decoder.1} parent=1 // pred_check
      _
    $region27: #{inner_product_decoder.1} parent=1 // pred_check_branch
      %130 = sbr.rel (0) target = $region29
    $region28: #{inner_product_decoder.1} parent=1 // pred_region
      %131 = dma.done [#allocation5], 128
    $region29: #{inner_product_decoder.1} parent=1 // pred_fallthru
      _
    %132 = vsyncpa [#allocation5], 1

</llo_original>
